<compile_context>
chip_gen: v5e
topology: v5e:2x2
jax: 0.10.0
libtpu: 0.0.40
codegen_flags: <defaults>
</compile_context>

<pallas_src>
import math

import jax
import jax.numpy as jnp
from jax import lax
from jax.experimental import pallas as pl
from jax.experimental.pallas import tpu as pltpu


def _round_up(x, m):
    return ((x + m - 1) // m) * m


def _pad2(a, rows, cols):
    pr, pc = rows - a.shape[0], cols - a.shape[1]
    if pr or pc:
        a = jnp.pad(a, ((0, pr), (0, pc)))
    return a


# ----------------------------------------------------------------------------
# Fused HyperConv kernel, batched over a leading "instance" grid axis.
# ----------------------------------------------------------------------------
def _make_hyperconv_kernel(inter, intra):
    def kernel(*refs):
        it = iter(refs)
        x_self_ref = next(it)
        w_self_ref = next(it)
        g_ref = next(it)
        if inter:
            x_oth_ref = next(it)
            w_oth_ref = next(it)
            h_ref = next(it)
        if intra:
            b_ref = next(it)
            wb_ref = next(it)
        bias_ref = next(it)
        out_ref = next(it)

        # (N_self, Fin) @ (Fin, Fout)
        xw = jnp.dot(x_self_ref[...], w_self_ref[...],
                     preferred_element_type=jnp.float32)
        # (N_self, N_self) @ (N_self, Fout)
        x = jnp.dot(g_ref[...], xw, preferred_element_type=jnp.float32)
        if inter:
            xw_o = jnp.dot(x_oth_ref[...], w_oth_ref[...],
                           preferred_element_type=jnp.float32)
            # H_other^T @ XW_other without materializing the transpose:
            # contract h_ref's axis 0 with xw_o's axis 0 (MXU-native).
            x = x + lax.dot_general(
                h_ref[...], xw_o,
                dimension_numbers=(((0,), (0,)), ((), ())),
                preferred_element_type=jnp.float32)
        if intra:
            x = x + jnp.dot(b_ref[...], wb_ref[...],
                            preferred_element_type=jnp.float32)
        x = x + bias_ref[...]                     # (1, Fout) broadcast over rows
        out_ref[...] = jnp.maximum(x, 0.0).astype(out_ref.dtype)

    return kernel


def hyperconv_batched(x_self, w_self, g, x_oth, w_oth, h_oth, b, wb, bias,
                      *, inter, intra):
    """Run `nb` independent HyperConv.forward instances in ONE pallas_call.

    Operands are stacked on a leading instance axis and pre-padded so node
    counts are multiples of 8 and feature dims multiples of 128 (lane-dense
    blocks / unmasked stores). grid=(nb,) with "parallel" semantics: instances
    shard across TensorCores on v7x and pipeline everywhere else.
    """
    nb, n_self, fin = x_self.shape
    fout = w_self.shape[2]

    def spec(shape):
        # Leading instance dim squeezed out of the kernel ref; trailing dims
        # are full-array blocks (full-dim exemption, padded to (8,128) anyway).
        return pl.BlockSpec((None,) + shape, lambda i: (i,) + (0,) * len(shape))

    operands = [x_self, w_self, g]
    in_specs = [spec((n_self, fin)), spec((fin, fout)), spec((n_self, n_self))]
    if inter:
        n_oth = x_oth.shape[1]
        operands += [x_oth, w_oth, h_oth]
        in_specs += [spec((n_oth, fin)), spec((fin, fout)), spec((n_oth, n_self))]
    if intra:
        operands += [b, wb]
        in_specs += [spec((n_self, fout)), spec((fout, fout))]
    operands.append(bias)
    in_specs.append(spec((1, fout)))

    return pl.pallas_call(
        _make_hyperconv_kernel(inter, intra),
        out_shape=jax.ShapeDtypeStruct((nb, n_self, fout), jnp.float32),
        grid=(nb,),
        in_specs=in_specs,
        out_specs=spec((n_self, fout)),
        compiler_params=pltpu.CompilerParams(
            dimension_semantics=("parallel",)),
    )(*operands)


# ----------------------------------------------------------------------------
# Parameter initialization (matches HyperConv.reset_parameters: U(-stdv, stdv))
# ----------------------------------------------------------------------------
def init_params(key, in_ft, out_ft, dty_nets):
    stdv = 1.0 / math.sqrt(out_ft)
    params = {"U": {}, "I": {}}
    for side in ("U", "I"):
        for dty in dty_nets:
            key, k1, k2, k3, k4 = jax.random.split(key, 5)
            params[side][dty] = {
                "Wu": jax.random.uniform(k1, (in_ft, out_ft), jnp.float32, -stdv, stdv),
                "Wi": jax.random.uniform(k2, (in_ft, out_ft), jnp.float32, -stdv, stdv),
                "bias": jax.random.uniform(k3, (out_ft,), jnp.float32, -stdv, stdv),
                "WB": jax.random.uniform(k4, (out_ft, out_ft), jnp.float32, -stdv, stdv),
            }
    return params, key


# ----------------------------------------------------------------------------
# MultiHyperConv.forward
# ----------------------------------------------------------------------------
def multi_hyper_conv_forward(params, Xu, Gu, Hu, Xi, Gi, Hi, dty_nets,
                             *, inter=True, intra=True):
    # NOTE: self.dropout is stored on the PyTorch module but never applied in
    # forward(), so there is nothing to translate for it.
    others = [d for d in dty_nets if d != "base"]
    Nu, in_ft = Xu["base"].shape
    Ni = Xi["base"].shape[0]
    out_ft = params["U"]["base"]["WB"].shape[0]

    # Padded sizes: nodes -> multiple of 8 (sublanes), features -> multiple of
    # 128 (lane-dense blocks, unmasked stores, full MXU N dimension).
    n_p = _round_up(max(Nu, Ni), 8)
    fin_p = _round_up(in_ft, 128)
    fout_p = _round_up(out_ft, 128)

    pad_x = lambda a: _pad2(a, n_p, fin_p)
    pad_g = lambda a: _pad2(a, n_p, n_p)          # also used for H (N, N) pads
    pad_w = lambda a: _pad2(a, fin_p, fout_p)
    pad_wb = lambda a: _pad2(a, fout_p, fout_p)
    pad_bias = lambda a: _pad2(a.reshape(1, -1), 1, fout_p)

    # ------------- phase 1: both 'base' convs in one batched call -----------
    # instance order: [user side, item side]; intra term disabled, so no dummy
    # B/WB tensors are allocated or DMA'd at all.
    pu, pi_ = params["U"]["base"], params["I"]["base"]
    xs = jnp.stack([pad_x(Xu["base"]), pad_x(Xi["base"])])
    ws = jnp.stack([pad_w(pu["Wu"]), pad_w(pi_["Wu"])])
    gs = jnp.stack([pad_g(Gu["base"]), pad_g(Gi["base"])])
    bias_s = jnp.stack([pad_bias(pu["bias"]), pad_bias(pi_["bias"])])
    if inter:
        xo = jnp.stack([pad_x(Xi["base"]), pad_x(Xu["base"])])
        wo = jnp.stack([pad_w(pu["Wi"]), pad_w(pi_["Wi"])])
        ho = jnp.stack([pad_g(Hi["base"]), pad_g(Hu["base"])])
    else:
        xo = wo = ho = None

    base_out = hyperconv_batched(xs, ws, gs, xo, wo, ho, None, None, bias_s,
                                 inter=inter, intra=False)
    base_xu_p = base_out[0]          # (n_p, fout_p) padded user-side base output
    base_xi_p = base_out[1]          # (n_p, fout_p) padded item-side base output
    out_xu = {"base": base_xu_p[:Nu, :out_ft]}
    out_xi = {"base": base_xi_p[:Ni, :out_ft]}

    # ----- phase 2: all remaining (side, dty) convs in one batched call -----
    if others:
        xs_l, ws_l, gs_l, xo_l, wo_l, ho_l, b_l, wb_l, bias_l = \
            [], [], [], [], [], [], [], [], []

        def add(p, x_s, g_s, x_o, h_o, b_base):
            xs_l.append(pad_x(x_s)); ws_l.append(pad_w(p["Wu"]))
            gs_l.append(pad_g(g_s))
            xo_l.append(pad_x(x_o)); wo_l.append(pad_w(p["Wi"]))
            ho_l.append(pad_g(h_o))
            b_l.append(b_base)       # already padded; row-wise term -> valid rows exact
            wb_l.append(pad_wb(p["WB"]))
            bias_l.append(pad_bias(p["bias"]))

        for dty in others:           # user side, conditioned on base_xu
            add(params["U"][dty], Xu[dty], Gu[dty], Xi[dty], Hi[dty], base_xu_p)
        for dty in others:           # item side, conditioned on base_xi
            add(params["I"][dty], Xi[dty], Gi[dty], Xu[dty], Hu[dty], base_xi_p)

        out2 = hyperconv_batched(
            jnp.stack(xs_l), jnp.stack(ws_l), jnp.stack(gs_l),
            jnp.stack(xo_l) if inter else None,
            jnp.stack(wo_l) if inter else None,
            jnp.stack(ho_l) if inter else None,
            jnp.stack(b_l) if intra else None,
            jnp.stack(wb_l) if intra else None,
            jnp.stack(bias_l),
            inter=inter, intra=intra)
        n_o = len(others)
        for k, dty in enumerate(others):
            out_xu[dty] = out2[k, :Nu, :out_ft]
            out_xi[dty] = out2[n_o + k, :Ni, :out_ft]
    return out_xu, out_xi


# ----------------------------------------------------------------------------
# Pure-JAX reference (mirrors HyperConv.forward literally) for a sanity check
# ----------------------------------------------------------------------------
def _hyperconv_ref(x_self, w_self, g, x_oth, w_oth, h_oth, b, wb, bias,
                   *, inter, intra):
    x = g @ (x_self @ w_self)
    if inter:
        x = x + h_oth.T @ (x_oth @ w_oth)
    if intra:
        x = x + b @ wb
    x = x + bias
    return jnp.maximum(x, 0.0)


def _forward_ref(params, Xu, Gu, Hu, Xi, Gi, Hi, dty_nets, *, inter=True, intra=True):
    others = [d for d in dty_nets if d != "base"]
    out_fu = params["U"]["base"]["WB"].shape[0]
    out_xu, out_xi = {}, {}
    p = params["U"]["base"]
    dummy_u = jnp.zeros((Xu["base"].shape[0], out_fu), jnp.float32)
    base_xu = _hyperconv_ref(Xu["base"], p["Wu"], Gu["base"], Xi["base"], p["Wi"],
                             Hi["base"], dummy_u, p["WB"], p["bias"],
                             inter=inter, intra=False)
    out_xu["base"] = base_xu
    for dty in others:
        p = params["U"][dty]
        out_xu[dty] = _hyperconv_ref(Xu[dty], p["Wu"], Gu[dty], Xi[dty], p["Wi"],
                                     Hi[dty], base_xu, p["WB"], p["bias"],
                                     inter=inter, intra=intra)
    p = params["I"]["base"]
    dummy_i = jnp.zeros((Xi["base"].shape[0], out_fu), jnp.float32)
    base_xi = _hyperconv_ref(Xi["base"], p["Wu"], Gi["base"], Xu["base"], p["Wi"],
                             Hu["base"], dummy_i, p["WB"], p["bias"],
                             inter=inter, intra=False)
    out_xi["base"] = base_xi
    for dty in others:
        p = params["I"][dty]
        out_xi[dty] = _hyperconv_ref(Xi[dty], p["Wu"], Gi[dty], Xu[dty], p["Wi"],
                                     Hu[dty], base_xi, p["WB"], p["bias"],
                                     inter=inter, intra=intra)
    return out_xu, out_xi


if __name__ == "__main__":
    in_ft, out_ft = 32, 32
    Nu, Ni = 16, 24                       # users / items
    dty_nets = ["base", "click", "buy"]   # 'base' + two extra relation types
    inter, intra = True, True

    key = jax.random.PRNGKey(0)
    params, key = init_params(key, in_ft, out_ft, dty_nets)

    Xu, Gu, Hu, Xi, Gi, Hi = {}, {}, {}, {}, {}, {}
    for dty in dty_nets:
        key, k1, k2, k3, k4, k5, k6 = jax.random.split(key, 7)
        Xu[dty] = jax.random.normal(k1, (Nu, in_ft), jnp.float32)
        Gu[dty] = jax.random.normal(k2, (Nu, Nu), jnp.float32)
        Hu[dty] = jax.random.normal(k3, (Nu, Ni), jnp.float32)
        Xi[dty] = jax.random.normal(k4, (Ni, in_ft), jnp.float32)
        Gi[dty] = jax.random.normal(k5, (Ni, Ni), jnp.float32)
        Hi[dty] = jax.random.normal(k6, (Ni, Nu), jnp.float32)

    out_xu, out_xi = multi_hyper_conv_forward(
        params, Xu, Gu, Hu, Xi, Gi, Hi, dty_nets, inter=inter, intra=intra)
    jax.block_until_ready((out_xu, out_xi))

    # sanity check against a pure-JAX reference of the PyTorch forward
    ref_xu, ref_xi = _forward_ref(
        params, Xu, Gu, Hu, Xi, Gi, Hi, dty_nets, inter=inter, intra=intra)
    for dty in dty_nets:
        assert jnp.allclose(out_xu[dty], ref_xu[dty], atol=1e-4, rtol=1e-4), dty
        assert jnp.allclose(out_xi[dty], ref_xi[dty], atol=1e-4, rtol=1e-4), dty

    print("KERNEL_OK")
</pallas_src>

<mosaic_0001>
module attributes {stable_mosaic.version = 11 : i64} {
  func.func @kernel(%arg0: i32, %arg1: memref<1x24x128xf32, #tpu.memory_space<vmem>>, %arg2: memref<1x128x128xf32, #tpu.memory_space<vmem>>, %arg3: memref<1x24x24xf32, #tpu.memory_space<vmem>>, %arg4: memref<1x24x128xf32, #tpu.memory_space<vmem>>, %arg5: memref<1x128x128xf32, #tpu.memory_space<vmem>>, %arg6: memref<1x24x24xf32, #tpu.memory_space<vmem>>, %arg7: memref<1x1x128xf32, #tpu.memory_space<vmem>>, %arg8: memref<1x24x128xf32, #tpu.memory_space<vmem>>) attributes {dimension_semantics = [#tpu.dimension_semantics<parallel>], iteration_bounds = array<i64: 2>, scalar_prefetch = 0 : i64, scratch_operands = 0 : i64, tpu.core_type = #tpu.core_type<tc>, window_params = [{transform_indices = @transform_0, window_bounds = array<i64: 1, 24, 128>}, {transform_indices = @transform_1, window_bounds = array<i64: 1, 128, 128>}, {transform_indices = @transform_2, window_bounds = array<i64: 1, 24, 24>}, {transform_indices = @transform_3, window_bounds = array<i64: 1, 24, 128>}, {transform_indices = @transform_4, window_bounds = array<i64: 1, 128, 128>}, {transform_indices = @transform_5, window_bounds = array<i64: 1, 24, 24>}, {transform_indices = @transform_6, window_bounds = array<i64: 1, 1, 128>}, {transform_indices = @transform_7, window_bounds = array<i64: 1, 24, 128>}]} {
    %c0 = arith.constant 0 : index
    %c0_0 = arith.constant 0 : index
    %c0_1 = arith.constant 0 : index
    %0 = vector.load %arg1[%c0, %c0_0, %c0_1] : memref<1x24x128xf32, #tpu.memory_space<vmem>>, vector<1x24x128xf32>
    %1 = vector.shape_cast %0 : vector<1x24x128xf32> to vector<24x128xf32>
    %c0_2 = arith.constant 0 : index
    %c0_3 = arith.constant 0 : index
    %c0_4 = arith.constant 0 : index
    %2 = vector.load %arg2[%c0_2, %c0_3, %c0_4] : memref<1x128x128xf32, #tpu.memory_space<vmem>>, vector<1x128x128xf32>
    %3 = vector.shape_cast %2 : vector<1x128x128xf32> to vector<128x128xf32>
    %cst = arith.constant dense<0.000000e+00> : vector<24x128xf32>
    %4 = tpu.matmul %1, %3, %cst {dimension_numbers = #tpu.dot_dimension_numbers<[1], [0], [0], [1], [0, 0, 1, 1], [], []>} : vector<24x128xf32>, vector<128x128xf32>, vector<24x128xf32> -> vector<24x128xf32>
    %c0_5 = arith.constant 0 : index
    %c0_6 = arith.constant 0 : index
    %c0_7 = arith.constant 0 : index
    %5 = vector.load %arg3[%c0_5, %c0_6, %c0_7] : memref<1x24x24xf32, #tpu.memory_space<vmem>>, vector<1x24x24xf32>
    %6 = vector.shape_cast %5 : vector<1x24x24xf32> to vector<24x24xf32>
    %cst_8 = arith.constant dense<0.000000e+00> : vector<24x128xf32>
    %7 = tpu.matmul %6, %4, %cst_8 {dimension_numbers = #tpu.dot_dimension_numbers<[1], [0], [0], [1], [0, 0, 1, 1], [], []>} : vector<24x24xf32>, vector<24x128xf32>, vector<24x128xf32> -> vector<24x128xf32>
    %c0_9 = arith.constant 0 : index
    %c0_10 = arith.constant 0 : index
    %c0_11 = arith.constant 0 : index
    %8 = vector.load %arg4[%c0_9, %c0_10, %c0_11] : memref<1x24x128xf32, #tpu.memory_space<vmem>>, vector<1x24x128xf32>
    %9 = vector.shape_cast %8 : vector<1x24x128xf32> to vector<24x128xf32>
    %c0_12 = arith.constant 0 : index
    %c0_13 = arith.constant 0 : index
    %c0_14 = arith.constant 0 : index
    %10 = vector.load %arg5[%c0_12, %c0_13, %c0_14] : memref<1x128x128xf32, #tpu.memory_space<vmem>>, vector<1x128x128xf32>
    %11 = vector.shape_cast %10 : vector<1x128x128xf32> to vector<128x128xf32>
    %cst_15 = arith.constant dense<0.000000e+00> : vector<24x128xf32>
    %12 = tpu.matmul %9, %11, %cst_15 {dimension_numbers = #tpu.dot_dimension_numbers<[1], [0], [0], [1], [0, 0, 1, 1], [], []>} : vector<24x128xf32>, vector<128x128xf32>, vector<24x128xf32> -> vector<24x128xf32>
    %c0_16 = arith.constant 0 : index
    %c0_17 = arith.constant 0 : index
    %c0_18 = arith.constant 0 : index
    %13 = vector.load %arg6[%c0_16, %c0_17, %c0_18] : memref<1x24x24xf32, #tpu.memory_space<vmem>>, vector<1x24x24xf32>
    %14 = vector.shape_cast %13 : vector<1x24x24xf32> to vector<24x24xf32>
    %cst_19 = arith.constant dense<0.000000e+00> : vector<24x128xf32>
    %15 = tpu.matmul %14, %12, %cst_19 {dimension_numbers = #tpu.dot_dimension_numbers<[0], [0], [1], [1], [0, 1, 1, 1], [], []>} : vector<24x24xf32>, vector<24x128xf32>, vector<24x128xf32> -> vector<24x128xf32>
    %16 = arith.addf %7, %15 : vector<24x128xf32>
    %c0_20 = arith.constant 0 : index
    %c0_21 = arith.constant 0 : index
    %c0_22 = arith.constant 0 : index
    %17 = vector.load %arg7[%c0_20, %c0_21, %c0_22] : memref<1x1x128xf32, #tpu.memory_space<vmem>>, vector<1x1x128xf32>
    %18 = vector.shape_cast %17 : vector<1x1x128xf32> to vector<1x128xf32>
    %19 = vector.broadcast %18 : vector<1x128xf32> to vector<24x128xf32>
    %20 = arith.addf %16, %19 : vector<24x128xf32>
    %cst_23 = arith.constant 0.000000e+00 : f32
    %21 = vector.broadcast %cst_23 : f32 to vector<24x128xf32>
    %22 = arith.maximumf %20, %21 : vector<24x128xf32>
    %c0_24 = arith.constant 0 : index
    %c0_25 = arith.constant 0 : index
    %c0_26 = arith.constant 0 : index
    %23 = vector.load %arg8[%c0_24, %c0_25, %c0_26] : memref<1x24x128xf32, #tpu.memory_space<vmem>>, vector<1x24x128xf32>
    %24 = vector.shape_cast %23 : vector<1x24x128xf32> to vector<24x128xf32>
    %25 = vector.shape_cast %22 : vector<24x128xf32> to vector<1x24x128xf32>
    tpu.vector_store %arg8[%c0_24, %c0_25, %c0_26], %25 {strides = array<i32>} : memref<1x24x128xf32, #tpu.memory_space<vmem>>, vector<1x24x128xf32>,
    return
  }
  func.func @transform_0(%arg0: i32) -> (i32, i32, i32) {
    %c0_i32 = arith.constant 0 : i32
    %c0_i32_0 = arith.constant 0 : i32
    %c0_i32_1 = arith.constant 0 : i32
    return %arg0, %c0_i32, %c0_i32_0 : i32, i32, i32
  }
  func.func @transform_1(%arg0: i32) -> (i32, i32, i32) {
    %c0_i32 = arith.constant 0 : i32
    %c0_i32_0 = arith.constant 0 : i32
    %c0_i32_1 = arith.constant 0 : i32
    return %arg0, %c0_i32, %c0_i32_0 : i32, i32, i32
  }
  func.func @transform_2(%arg0: i32) -> (i32, i32, i32) {
    %c0_i32 = arith.constant 0 : i32
    %c0_i32_0 = arith.constant 0 : i32
    %c0_i32_1 = arith.constant 0 : i32
    return %arg0, %c0_i32, %c0_i32_0 : i32, i32, i32
  }
  func.func @transform_3(%arg0: i32) -> (i32, i32, i32) {
    %c0_i32 = arith.constant 0 : i32
    %c0_i32_0 = arith.constant 0 : i32
    %c0_i32_1 = arith.constant 0 : i32
    return %arg0, %c0_i32, %c0_i32_0 : i32, i32, i32
  }
  func.func @transform_4(%arg0: i32) -> (i32, i32, i32) {
    %c0_i32 = arith.constant 0 : i32
    %c0_i32_0 = arith.constant 0 : i32
    %c0_i32_1 = arith.constant 0 : i32
    return %arg0, %c0_i32, %c0_i32_0 : i32, i32, i32
  }
  func.func @transform_5(%arg0: i32) -> (i32, i32, i32) {
    %c0_i32 = arith.constant 0 : i32
    %c0_i32_0 = arith.constant 0 : i32
    %c0_i32_1 = arith.constant 0 : i32
    return %arg0, %c0_i32, %c0_i32_0 : i32, i32, i32
  }
  func.func @transform_6(%arg0: i32) -> (i32, i32, i32) {
    %c0_i32 = arith.constant 0 : i32
    %c0_i32_0 = arith.constant 0 : i32
    %c0_i32_1 = arith.constant 0 : i32
    return %arg0, %c0_i32, %c0_i32_0 : i32, i32, i32
  }
  func.func @transform_7(%arg0: i32) -> (i32, i32, i32) {
    %c0_i32 = arith.constant 0 : i32
    %c0_i32_0 = arith.constant 0 : i32
    %c0_i32_1 = arith.constant 0 : i32
    return %arg0, %c0_i32, %c0_i32_0 : i32, i32, i32
  }
}

</mosaic_0001>

<llo_original>
// kernel: tpu_custom_call.1
$region0: #{tpu_custom_call.1}
  #allocation0 [shape = 'u32[]', space=smem, size = 0x4, offset = 0x4, fixed_abs, tag = 'smem constant byte address 0x4 - core index']
  #allocation1 [shape = 'u32[72,128]{1,0:T(1,128)}', space=vmem, size = 0x9000, scoped, tag = 'internal scratch']
  %s0 = inlined_call_operand.hbm [shape: f32[2,24,128], index: 0, kind: input, shape index: {}]
  %s1 = inlined_call_operand.hbm [shape: f32[2,128,128], index: 1, kind: input, shape index: {}]
  %s2 = inlined_call_operand.hbm [shape: f32[2,24,24], index: 2, kind: input, shape index: {}]
  %s3 = inlined_call_operand.hbm [shape: f32[2,24,128], index: 3, kind: input, shape index: {}]
  %s4 = inlined_call_operand.hbm [shape: f32[2,128,128], index: 4, kind: input, shape index: {}]
  %s5 = inlined_call_operand.hbm [shape: f32[2,24,24], index: 5, kind: input, shape index: {}]
  %s6 = inlined_call_operand.vmem [shape: f32[2,1,128], index: 6, kind: input, shape index: {}]
  %s7 = inlined_call_operand.hbm [shape: f32[2,24,128], index: 7, kind: output, shape index: {}]
  %s8 = sld [smem:[#allocation0]]
  $region85: #{tpu_custom_call.1} parent=0
    _
  %s10 = ssub.s32 1, %s8
  %s11 = scalar_select 0, %s10, %s8
  $region1: #{tpu_custom_call.1} parent=0
    #allocation2 [shape = 'u8[24576]{0}', space=vmem, size = 0x6000, scoped, tag = 'input window, operand 0']
    #allocation3 [shape = 's32[2]{0}', space=sflag, size = 0x8, scoped, tag = 'scoped memory for tpu_custom_call.1']
    #allocation4 [shape = 's32[2]{0}', space=sflag, size = 0x8, scoped, tag = 'scoped memory for tpu_custom_call.1']
    #allocation5 [shape = 'u8[131072]{0}', space=vmem, size = 0x20000, scoped, tag = 'input window, operand 1']
    #allocation6 [shape = 's32[2]{0}', space=sflag, size = 0x8, scoped, tag = 'scoped memory for tpu_custom_call.1']
    #allocation7 [shape = 'u8[24576]{0}', space=vmem, size = 0x6000, scoped, tag = 'input window, operand 2']
    #allocation8 [shape = 'u8[24576]{0}', space=vmem, size = 0x6000, scoped, tag = 'input window, operand 3']
    #allocation9 [shape = 's32[2]{0}', space=sflag, size = 0x8, scoped, tag = 'scoped memory for tpu_custom_call.1']
    #allocation10 [shape = 'u8[131072]{0}', space=vmem, size = 0x20000, scoped, tag = 'input window, operand 4']
    #allocation11 [shape = 'u8[24576]{0}', space=vmem, size = 0x6000, scoped, tag = 'input window, operand 5']
    #allocation12 [shape = 's32[2]{0}', space=sflag, size = 0x8, scoped, tag = 'scoped memory for tpu_custom_call.1']
    #allocation13 [shape = 'u8[24576]{0}', space=vmem, size = 0x6000, scoped, tag = 'output window, operand 0']
    %12 = vsyncpa [#allocation3], 0
    %s13 = scalar_lea.sflag [#allocation3], 1
    %14 = vsyncpa %s13, 0
    %15 = vsyncpa [#allocation6], 0
    %s16 = scalar_lea.sflag [#allocation6], 1
    %17 = vsyncpa %s16, 0
    %18 = vsyncpa [#allocation9], 0
    %s19 = scalar_lea.sflag [#allocation9], 1
    %20 = vsyncpa %s19, 0
    %21 = vsyncpa [#allocation12], 0
    %s22 = scalar_lea.sflag [#allocation12], 1
    %23 = vsyncpa %s22, 0
    %24 = vsyncpa [#allocation4], 0
    %s25 = scalar_lea.sflag [#allocation4], 1
    %26 = vsyncpa %s25, 0
    loop: start=0, step=1, limit=4
    $region2: #{tpu_custom_call.1} parent=1 // loop_pre_header
      _
    $region3: #{tpu_custom_call.1} parent=1 // loop_header
      %s28 = sphi 0, %s32
      %p29 = scmp.ge.s32.totalorder %s28, 4
      %s38 = sphi 0, %s40
      %s41 = sphi 0, %s38
      %s42 = sphi 0, %s41
      %s58 = sphi 0, %s42
      %s64 = sphi 0, %s66
      %s67 = sphi 0, %s64
      %s68 = sphi 0, %s67
      %s84 = sphi 0, %s68
      %s90 = sphi 0, %s92
      %s93 = sphi 0, %s90
      %s94 = sphi 0, %s93
      %s110 = sphi 0, %s94
      %s116 = sphi 0, %s118
      %s119 = sphi 0, %s116
      %s120 = sphi 0, %s119
      %s136 = sphi 0, %s120
      %s142 = sphi 0, %s144
      %s145 = sphi 0, %s142
      %s146 = sphi 0, %s145
      %s162 = sphi 0, %s146
      %s168 = sphi 0, %s170
      %s171 = sphi 0, %s168
      %s172 = sphi 0, %s171
      %s188 = sphi 0, %s172
      %s194 = sphi 0, %s196
      %s197 = sphi 0, %s194
      %s198 = sphi 0, %s197
      %s214 = sphi 0, %s198
      %s220 = sphi 0, %s222
      %s223 = sphi 0, %s220
      %s224 = sphi 0, %s223
      %s240 = sphi 0, %s224
    $region4: #{tpu_custom_call.1} parent=1 // loop_header_branch
      %31 = sbr.rel (%p29) target = $region8
    $region5: #{tpu_custom_call.1} parent=1 // loop_body
      %s33 = ssub.s32 %s28, 1
      %s34 = ssub.s32 %s28, 2
      %s35 = sadd.s32 %s28, 1
      %s36 = ssub.s32 %s28, %s35
      %p37 = scmp.eq.s32.totalorder %s36, 0
      %s39 = sadd.s32 %s38, 1
      %s40 = scalar_select %p37, %s38, %s39
      %p43 = pneg %p37
      %p44 = scmp.eq.s32.totalorder %s28, 1
      %p45 = por %p43, %p44
      %p46 = scmp.ne.s32.totalorder %s38, %s41
      %p47 = scmp.eq.s32.totalorder %s28, 0
      %p48 = por %p46, %p47
      %p49 = scmp.ne.s32.totalorder %s38, %s41
      %p50 = scmp.eq.s32.totalorder %s33, 1
      %p51 = por %p49, %p50
      %p52 = scmp.ne.s32.totalorder %s41, %s42
      %p53 = scmp.eq.s32.totalorder %s33, 0
      %p54 = por %p52, %p53
      %p55 = scmp.ne.s32.totalorder %s41, %s42
      %p56 = scmp.eq.s32.totalorder %s34, 1
      %p57 = por %p55, %p56
      %p59 = scmp.ne.s32.totalorder %s42, %s58
      %p60 = scmp.eq.s32.totalorder %s34, 0
      %p61 = por %p59, %p60
      %s62 = ssub.s32 %s28, %s35
      %p63 = scmp.eq.s32.totalorder %s62, 0
      %s65 = sadd.s32 %s64, 1
      %s66 = scalar_select %p63, %s64, %s65
      %p69 = pneg %p63
      %p70 = scmp.eq.s32.totalorder %s28, 1
      %p71 = por %p69, %p70
      %p72 = scmp.ne.s32.totalorder %s64, %s67
      %p73 = scmp.eq.s32.totalorder %s28, 0
      %p74 = por %p72, %p73
      %p75 = scmp.ne.s32.totalorder %s64, %s67
      %p76 = scmp.eq.s32.totalorder %s33, 1
      %p77 = por %p75, %p76
      %p78 = scmp.ne.s32.totalorder %s67, %s68
      %p79 = scmp.eq.s32.totalorder %s33, 0
      %p80 = por %p78, %p79
      %p81 = scmp.ne.s32.totalorder %s67, %s68
      %p82 = scmp.eq.s32.totalorder %s34, 1
      %p83 = por %p81, %p82
      %p85 = scmp.ne.s32.totalorder %s68, %s84
      %p86 = scmp.eq.s32.totalorder %s34, 0
      %p87 = por %p85, %p86
      %s88 = ssub.s32 %s28, %s35
      %p89 = scmp.eq.s32.totalorder %s88, 0
      %s91 = sadd.s32 %s90, 1
      %s92 = scalar_select %p89, %s90, %s91
      %p95 = pneg %p89
      %p96 = scmp.eq.s32.totalorder %s28, 1
      %p97 = por %p95, %p96
      %p98 = scmp.ne.s32.totalorder %s90, %s93
      %p99 = scmp.eq.s32.totalorder %s28, 0
      %p100 = por %p98, %p99
      %p101 = scmp.ne.s32.totalorder %s90, %s93
      %p102 = scmp.eq.s32.totalorder %s33, 1
      %p103 = por %p101, %p102
      %p104 = scmp.ne.s32.totalorder %s93, %s94
      %p105 = scmp.eq.s32.totalorder %s33, 0
      %p106 = por %p104, %p105
      %p107 = scmp.ne.s32.totalorder %s93, %s94
      %p108 = scmp.eq.s32.totalorder %s34, 1
      %p109 = por %p107, %p108
      %p111 = scmp.ne.s32.totalorder %s94, %s110
      %p112 = scmp.eq.s32.totalorder %s34, 0
      %p113 = por %p111, %p112
      %s114 = ssub.s32 %s28, %s35
      %p115 = scmp.eq.s32.totalorder %s114, 0
      %s117 = sadd.s32 %s116, 1
      %s118 = scalar_select %p115, %s116, %s117
      %p121 = pneg %p115
      %p122 = scmp.eq.s32.totalorder %s28, 1
      %p123 = por %p121, %p122
      %p124 = scmp.ne.s32.totalorder %s116, %s119
      %p125 = scmp.eq.s32.totalorder %s28, 0
      %p126 = por %p124, %p125
      %p127 = scmp.ne.s32.totalorder %s116, %s119
      %p128 = scmp.eq.s32.totalorder %s33, 1
      %p129 = por %p127, %p128
      %p130 = scmp.ne.s32.totalorder %s119, %s120
      %p131 = scmp.eq.s32.totalorder %s33, 0
      %p132 = por %p130, %p131
      %p133 = scmp.ne.s32.totalorder %s119, %s120
      %p134 = scmp.eq.s32.totalorder %s34, 1
      %p135 = por %p133, %p134
      %p137 = scmp.ne.s32.totalorder %s120, %s136
      %p138 = scmp.eq.s32.totalorder %s34, 0
      %p139 = por %p137, %p138
      %s140 = ssub.s32 %s28, %s35
      %p141 = scmp.eq.s32.totalorder %s140, 0
      %s143 = sadd.s32 %s142, 1
      %s144 = scalar_select %p141, %s142, %s143
      %p147 = pneg %p141
      %p148 = scmp.eq.s32.totalorder %s28, 1
      %p149 = por %p147, %p148
      %p150 = scmp.ne.s32.totalorder %s142, %s145
      %p151 = scmp.eq.s32.totalorder %s28, 0
      %p152 = por %p150, %p151
      %p153 = scmp.ne.s32.totalorder %s142, %s145
      %p154 = scmp.eq.s32.totalorder %s33, 1
      %p155 = por %p153, %p154
      %p156 = scmp.ne.s32.totalorder %s145, %s146
      %p157 = scmp.eq.s32.totalorder %s33, 0
      %p158 = por %p156, %p157
      %p159 = scmp.ne.s32.totalorder %s145, %s146
      %p160 = scmp.eq.s32.totalorder %s34, 1
      %p161 = por %p159, %p160
      %p163 = scmp.ne.s32.totalorder %s146, %s162
      %p164 = scmp.eq.s32.totalorder %s34, 0
      %p165 = por %p163, %p164
      %s166 = ssub.s32 %s28, %s35
      %p167 = scmp.eq.s32.totalorder %s166, 0
      %s169 = sadd.s32 %s168, 1
      %s170 = scalar_select %p167, %s168, %s169
      %p173 = pneg %p167
      %p174 = scmp.eq.s32.totalorder %s28, 1
      %p175 = por %p173, %p174
      %p176 = scmp.ne.s32.totalorder %s168, %s171
      %p177 = scmp.eq.s32.totalorder %s28, 0
      %p178 = por %p176, %p177
      %p179 = scmp.ne.s32.totalorder %s168, %s171
      %p180 = scmp.eq.s32.totalorder %s33, 1
      %p181 = por %p179, %p180
      %p182 = scmp.ne.s32.totalorder %s171, %s172
      %p183 = scmp.eq.s32.totalorder %s33, 0
      %p184 = por %p182, %p183
      %p185 = scmp.ne.s32.totalorder %s171, %s172
      %p186 = scmp.eq.s32.totalorder %s34, 1
      %p187 = por %p185, %p186
      %p189 = scmp.ne.s32.totalorder %s172, %s188
      %p190 = scmp.eq.s32.totalorder %s34, 0
      %p191 = por %p189, %p190
      %s192 = ssub.s32 %s28, %s35
      %p193 = scmp.eq.s32.totalorder %s192, 0
      %s195 = sadd.s32 %s194, 1
      %s196 = scalar_select %p193, %s194, %s195
      %p199 = pneg %p193
      %p200 = scmp.eq.s32.totalorder %s28, 1
      %p201 = por %p199, %p200
      %p202 = scmp.ne.s32.totalorder %s194, %s197
      %p203 = scmp.eq.s32.totalorder %s28, 0
      %p204 = por %p202, %p203
      %p205 = scmp.ne.s32.totalorder %s194, %s197
      %p206 = scmp.eq.s32.totalorder %s33, 1
      %p207 = por %p205, %p206
      %p208 = scmp.ne.s32.totalorder %s197, %s198
      %p209 = scmp.eq.s32.totalorder %s33, 0
      %p210 = por %p208, %p209
      %p211 = scmp.ne.s32.totalorder %s197, %s198
      %p212 = scmp.eq.s32.totalorder %s34, 1
      %p213 = por %p211, %p212
      %p215 = scmp.ne.s32.totalorder %s198, %s214
      %p216 = scmp.eq.s32.totalorder %s34, 0
      %p217 = por %p215, %p216
      %s218 = ssub.s32 %s28, %s35
      %p219 = scmp.eq.s32.totalorder %s218, 0
      %s221 = sadd.s32 %s220, 1
      %s222 = scalar_select %p219, %s220, %s221
      %p225 = pneg %p219
      %p226 = scmp.eq.s32.totalorder %s28, 1
      %p227 = por %p225, %p226
      %p228 = scmp.ne.s32.totalorder %s220, %s223
      %p229 = scmp.eq.s32.totalorder %s28, 0
      %p230 = por %p228, %p229
      %p231 = scmp.ne.s32.totalorder %s220, %s223
      %p232 = scmp.eq.s32.totalorder %s33, 1
      %p233 = por %p231, %p232
      %p234 = scmp.ne.s32.totalorder %s223, %s224
      %p235 = scmp.eq.s32.totalorder %s33, 0
      %p236 = por %p234, %p235
      %p237 = scmp.ne.s32.totalorder %s223, %s224
      %p238 = scmp.eq.s32.totalorder %s34, 1
      %p239 = por %p237, %p238
      %p241 = scmp.ne.s32.totalorder %s224, %s240
      %p242 = scmp.eq.s32.totalorder %s34, 0
      %p243 = por %p241, %p242
      %p244 = scmp.le.s32.totalorder 1, %s28
      %p245 = scmp.lt.s32.totalorder %s28, 3
      %p246 = pnand %p244, %p245
      %p247 = pneg %p246
      // Predicated region
      $region9: #{tpu_custom_call.1} parent=5 // pred_check
        _
      $region10: #{tpu_custom_call.1} parent=5 // pred_check_branch
        %249 = sbr.rel (%p246) target = $region12
      $region11: #{tpu_custom_call.1} parent=5 // pred_region
        %s250 = ssub.s32 %s28, 1
      $region12: #{tpu_custom_call.1} parent=5 // pred_fallthru
        _
      %p251 = scmp.lt.s32.totalorder %s28, 2
      // Predicated region
      $region13: #{tpu_custom_call.1} parent=5 // pred_check
        %p252 = pneg %p251
      $region14: #{tpu_custom_call.1} parent=5 // pred_check_branch
        %254 = sbr.rel (%p252) target = $region16
      $region15: #{tpu_custom_call.1} parent=5 // pred_region
        // Predicated region
        $region17: #{tpu_custom_call.1} parent=15 // pred_check
          %p255 = pneg %p48
        $region18: #{tpu_custom_call.1} parent=15 // pred_check_branch
          %257 = sbr.rel (%p255) target = $region20
        $region19: #{tpu_custom_call.1} parent=15 // pred_region
          %s258 = sand.u32 %s38, 1
          %s259 = scalar_lea.sflag [#allocation3], %s258
          %s260 = sand.u32 %s38, 1
          %s261 = smul.addr %s260, 24
          %s262 = scalar_lea.vmem [#allocation2], %s261
          %264 = vsyncadd %s259, 0
          %s265 = smul.addr %s28, 3
          %s266 = smul.addr %s265, 8
          %s267 = scalar_lea.hbm %s0, %s266
          %s268 = sshll.u32 %s267, 4
          %s269 = int_to_ptr.hbm [resolvable:$true] %s268
          %s270 = sshll.u32 %s262, 4
          %s271 = int_to_ptr.vmem [resolvable:$true] %s270
          %276 = dma.hbm_to_vmem [thread:$0]  %s269, 384, %s271, %s259, 128, 128, 8
        $region20: #{tpu_custom_call.1} parent=15 // pred_fallthru
          _
        // Predicated region
        $region21: #{tpu_custom_call.1} parent=15 // pred_check
          %p277 = pneg %p74
        $region22: #{tpu_custom_call.1} parent=15 // pred_check_branch
          %279 = sbr.rel (%p277) target = $region24
        $region23: #{tpu_custom_call.1} parent=15 // pred_region
          %s280 = sand.u32 %s28, 1
          %s281 = scalar_lea.sflag [#allocation6], %s280
          %s282 = sand.u32 %s64, 1
          %s283 = smul.addr %s282, 128
          %s284 = scalar_lea.vmem [#allocation5], %s283
          %286 = vsyncadd %s281, 0
          %s287 = smul.addr %s28, 16
          %s288 = smul.addr %s287, 8
          %s289 = scalar_lea.hbm %s1, %s288
          %s290 = sshll.u32 %s289, 4
          %s291 = int_to_ptr.hbm [resolvable:$true] %s290
          %s292 = sshll.u32 %s284, 4
          %s293 = int_to_ptr.vmem [resolvable:$true] %s292
          %298 = dma.hbm_to_vmem [thread:$0]  %s291, 2048, %s293, %s281, 128, 128, 8
        $region24: #{tpu_custom_call.1} parent=15 // pred_fallthru
          _
        // Predicated region
        $region25: #{tpu_custom_call.1} parent=15 // pred_check
          %p299 = pneg %p100
        $region26: #{tpu_custom_call.1} parent=15 // pred_check_branch
          %301 = sbr.rel (%p299) target = $region28
        $region27: #{tpu_custom_call.1} parent=15 // pred_region
          %s302 = sand.u32 %s28, 1
          %s303 = scalar_lea.sflag [#allocation6], %s302
          %s304 = sand.u32 %s90, 1
          %s305 = smul.addr %s304, 24
          %s306 = scalar_lea.vmem [#allocation7], %s305
          %308 = vsyncadd %s303, 0
          %s309 = smul.addr %s28, 3
          %s310 = smul.addr %s309, 8
          %s311 = scalar_lea.hbm %s2, %s310
          %s312 = sshll.u32 %s311, 4
          %s313 = int_to_ptr.hbm [resolvable:$true] %s312
          %s314 = sshll.u32 %s306, 4
          %s315 = int_to_ptr.vmem [resolvable:$true] %s314
          %320 = dma.hbm_to_vmem [thread:$0]  %s313, 384, %s315, %s303, 128, 128, 8
        $region28: #{tpu_custom_call.1} parent=15 // pred_fallthru
          _
        // Predicated region
        $region29: #{tpu_custom_call.1} parent=15 // pred_check
          %p321 = pneg %p126
        $region30: #{tpu_custom_call.1} parent=15 // pred_check_branch
          %323 = sbr.rel (%p321) target = $region32
        $region31: #{tpu_custom_call.1} parent=15 // pred_region
          %s324 = sand.u32 %s28, 1
          %s325 = scalar_lea.sflag [#allocation9], %s324
          %s326 = sand.u32 %s116, 1
          %s327 = smul.addr %s326, 24
          %s328 = scalar_lea.vmem [#allocation8], %s327
          %330 = vsyncadd %s325, 0
          %s331 = smul.addr %s28, 3
          %s332 = smul.addr %s331, 8
          %s333 = scalar_lea.hbm %s3, %s332
          %s334 = sshll.u32 %s333, 4
          %s335 = int_to_ptr.hbm [resolvable:$true] %s334
          %s336 = sshll.u32 %s328, 4
          %s337 = int_to_ptr.vmem [resolvable:$true] %s336
          %342 = dma.hbm_to_vmem [thread:$0]  %s335, 384, %s337, %s325, 128, 128, 8
        $region32: #{tpu_custom_call.1} parent=15 // pred_fallthru
          _
        // Predicated region
        $region33: #{tpu_custom_call.1} parent=15 // pred_check
          %p343 = pneg %p152
        $region34: #{tpu_custom_call.1} parent=15 // pred_check_branch
          %345 = sbr.rel (%p343) target = $region36
        $region35: #{tpu_custom_call.1} parent=15 // pred_region
          %s346 = sand.u32 %s28, 1
          %s347 = scalar_lea.sflag [#allocation9], %s346
          %s348 = sand.u32 %s142, 1
          %s349 = smul.addr %s348, 128
          %s350 = scalar_lea.vmem [#allocation10], %s349
          %352 = vsyncadd %s347, 0
          %s353 = smul.addr %s28, 16
          %s354 = smul.addr %s353, 8
          %s355 = scalar_lea.hbm %s4, %s354
          %s356 = sshll.u32 %s355, 4
          %s357 = int_to_ptr.hbm [resolvable:$true] %s356
          %s358 = sshll.u32 %s350, 4
          %s359 = int_to_ptr.vmem [resolvable:$true] %s358
          %364 = dma.hbm_to_vmem [thread:$0]  %s357, 2048, %s359, %s347, 128, 128, 8
        $region36: #{tpu_custom_call.1} parent=15 // pred_fallthru
          _
        // Predicated region
        $region37: #{tpu_custom_call.1} parent=15 // pred_check
          %p365 = pneg %p178
        $region38: #{tpu_custom_call.1} parent=15 // pred_check_branch
          %367 = sbr.rel (%p365) target = $region40
        $region39: #{tpu_custom_call.1} parent=15 // pred_region
          %s368 = sand.u32 %s168, 1
          %s369 = scalar_lea.sflag [#allocation12], %s368
          %s370 = sand.u32 %s168, 1
          %s371 = smul.addr %s370, 24
          %s372 = scalar_lea.vmem [#allocation11], %s371
          %374 = vsyncadd %s369, 0
          %s375 = smul.addr %s28, 3
          %s376 = smul.addr %s375, 8
          %s377 = scalar_lea.hbm %s5, %s376
          %s378 = sshll.u32 %s377, 4
          %s379 = int_to_ptr.hbm [resolvable:$true] %s378
          %s380 = sshll.u32 %s372, 4
          %s381 = int_to_ptr.vmem [resolvable:$true] %s380
          %386 = dma.hbm_to_vmem [thread:$0]  %s379, 384, %s381, %s369, 128, 128, 8
        $region40: #{tpu_custom_call.1} parent=15 // pred_fallthru
          _
        // Predicated region
        $region41: #{tpu_custom_call.1} parent=15 // pred_check
          %p387 = pneg %p204
        $region42: #{tpu_custom_call.1} parent=15 // pred_check_branch
          %389 = sbr.rel (%p387) target = $region44
        $region43: #{tpu_custom_call.1} parent=15 // pred_region
          %p390 = scmp.lt.s32.totalorder %s28, 1
          %s391 = scalar_select %p390, %s28, 1
          %s392 = scalar_lea.vmem %s6, %s391
        $region44: #{tpu_custom_call.1} parent=15 // pred_fallthru
          _
      $region16: #{tpu_custom_call.1} parent=5 // pred_fallthru
        _
      %p393 = scmp.le.s32.totalorder 1, %s28
      %p394 = scmp.lt.s32.totalorder %s28, 3
      %p395 = pnand %p393, %p394
      %p396 = pneg %p395
      // Predicated region
      $region45: #{tpu_custom_call.1} parent=5 // pred_check
        _
      $region46: #{tpu_custom_call.1} parent=5 // pred_check_branch
        %398 = sbr.rel (%p395) target = $region48
      $region47: #{tpu_custom_call.1} parent=5 // pred_region
        %s399 = ssub.s32 %s28, 1
        %s400 = sand.u32 %s41, 1
        %s401 = scalar_lea.sflag [#allocation3], %s400
        %s402 = sand.u32 %s41, 1
        %s403 = smul.addr %s402, 24
        %s404 = scalar_lea.vmem [#allocation2], %s403
        // Predicated region
        $region49: #{tpu_custom_call.1} parent=47 // pred_check
          %p405 = pneg %p54
        $region50: #{tpu_custom_call.1} parent=47 // pred_check_branch
          %407 = sbr.rel (%p405) target = $region52
        $region51: #{tpu_custom_call.1} parent=47 // pred_region
          %409 = dma.done %s401, 384
        $region52: #{tpu_custom_call.1} parent=47 // pred_fallthru
          _
        %s410 = sand.u32 %s33, 1
        %s411 = scalar_lea.sflag [#allocation6], %s410
        %s412 = sand.u32 %s67, 1
        %s413 = smul.addr %s412, 128
        %s414 = scalar_lea.vmem [#allocation5], %s413
        // Predicated region
        $region53: #{tpu_custom_call.1} parent=47 // pred_check
          %p415 = pneg %p80
        $region54: #{tpu_custom_call.1} parent=47 // pred_check_branch
          %417 = sbr.rel (%p415) target = $region56
        $region55: #{tpu_custom_call.1} parent=47 // pred_region
          %419 = dma.done %s411, 2048
        $region56: #{tpu_custom_call.1} parent=47 // pred_fallthru
          _
        %s420 = sand.u32 %s33, 1
        %s421 = scalar_lea.sflag [#allocation6], %s420
        %s422 = sand.u32 %s93, 1
        %s423 = smul.addr %s422, 24
        %s424 = scalar_lea.vmem [#allocation7], %s423
        // Predicated region
        $region57: #{tpu_custom_call.1} parent=47 // pred_check
          %p425 = pneg %p106
        $region58: #{tpu_custom_call.1} parent=47 // pred_check_branch
          %427 = sbr.rel (%p425) target = $region60
        $region59: #{tpu_custom_call.1} parent=47 // pred_region
          %429 = dma.done %s421, 384
        $region60: #{tpu_custom_call.1} parent=47 // pred_fallthru
          _
        %s430 = sand.u32 %s33, 1
        %s431 = scalar_lea.sflag [#allocation9], %s430
        %s432 = sand.u32 %s119, 1
        %s433 = smul.addr %s432, 24
        %s434 = scalar_lea.vmem [#allocation8], %s433
        // Predicated region
        $region61: #{tpu_custom_call.1} parent=47 // pred_check
          %p435 = pneg %p132
        $region62: #{tpu_custom_call.1} parent=47 // pred_check_branch
          %437 = sbr.rel (%p435) target = $region64
        $region63: #{tpu_custom_call.1} parent=47 // pred_region
          %439 = dma.done %s431, 384
        $region64: #{tpu_custom_call.1} parent=47 // pred_fallthru
          _
        %s440 = sand.u32 %s33, 1
        %s441 = scalar_lea.sflag [#allocation9], %s440
        %s442 = sand.u32 %s145, 1
        %s443 = smul.addr %s442, 128
        %s444 = scalar_lea.vmem [#allocation10], %s443
        // Predicated region
        $region65: #{tpu_custom_call.1} parent=47 // pred_check
          %p445 = pneg %p158
        $region66: #{tpu_custom_call.1} parent=47 // pred_check_branch
          %447 = sbr.rel (%p445) target = $region68
        $region67: #{tpu_custom_call.1} parent=47 // pred_region
          %449 = dma.done %s441, 2048
        $region68: #{tpu_custom_call.1} parent=47 // pred_fallthru
          _
        %s450 = sand.u32 %s171, 1
        %s451 = scalar_lea.sflag [#allocation12], %s450
        %s452 = sand.u32 %s171, 1
        %s453 = smul.addr %s452, 24
        %s454 = scalar_lea.vmem [#allocation11], %s453
        // Predicated region
        $region69: #{tpu_custom_call.1} parent=47 // pred_check
          %p455 = pneg %p184
        $region70: #{tpu_custom_call.1} parent=47 // pred_check_branch
          %457 = sbr.rel (%p455) target = $region72
        $region71: #{tpu_custom_call.1} parent=47 // pred_region
          %459 = dma.done %s451, 384
        $region72: #{tpu_custom_call.1} parent=47 // pred_fallthru
          _
        %s460 = sand.u32 %s41, 1
        %s461 = scalar_lea.sflag [#allocation3], %s460
        %s462 = sand.u32 %s41, 1
        %s463 = smul.addr %s462, 24
        %s464 = scalar_lea.vmem [#allocation2], %s463
        %p465 = pneg %p54
        %p466 = pneg %p51
        %s467 = sand.u32 %s33, 1
        %s468 = scalar_lea.sflag [#allocation6], %s467
        %s469 = sand.u32 %s67, 1
        %s470 = smul.addr %s469, 128
        %s471 = scalar_lea.vmem [#allocation5], %s470
        %p472 = pneg %p80
        %p473 = pneg %p77
        %s474 = sand.u32 %s33, 1
        %s475 = scalar_lea.sflag [#allocation6], %s474
        %s476 = sand.u32 %s93, 1
        %s477 = smul.addr %s476, 24
        %s478 = scalar_lea.vmem [#allocation7], %s477
        %p479 = pneg %p106
        %p480 = pneg %p103
        %s481 = sand.u32 %s33, 1
        %s482 = scalar_lea.sflag [#allocation9], %s481
        %s483 = sand.u32 %s119, 1
        %s484 = smul.addr %s483, 24
        %s485 = scalar_lea.vmem [#allocation8], %s484
        %p486 = pneg %p132
        %p487 = pneg %p129
        %s488 = sand.u32 %s33, 1
        %s489 = scalar_lea.sflag [#allocation9], %s488
        %s490 = sand.u32 %s145, 1
        %s491 = smul.addr %s490, 128
        %s492 = scalar_lea.vmem [#allocation10], %s491
        %p493 = pneg %p158
        %p494 = pneg %p155
        %s495 = sand.u32 %s171, 1
        %s496 = scalar_lea.sflag [#allocation12], %s495
        %s497 = sand.u32 %s171, 1
        %s498 = smul.addr %s497, 24
        %s499 = scalar_lea.vmem [#allocation11], %s498
        %p500 = pneg %p184
        %p501 = pneg %p181
        %p502 = scmp.lt.s32.totalorder %s33, 1
        %s503 = scalar_select %p502, %s33, 1
        %s504 = scalar_lea.vmem %s6, %s503
        %p505 = pneg %p210
        %p506 = pneg %p207
        %p507 = pneg %p236
        %p508 = pneg %p233
        %s509 = sand.u32 %s223, 1
        %s510 = scalar_lea.sflag [#allocation4], %s509
        %s511 = sand.u32 %s223, 1
        %s512 = smul.addr %s511, 24
        %s513 = scalar_lea.vmem [#allocation13], %s512
        %p514 = scmp.lt.s32.totalorder %s33, 1
        %s515 = scalar_select %p514, %s33, 1
        %s516 = scalar_lea.vmem %s6, %s515
        %v517 = vld [vmem:[%s404] sm:$0xff]
        %v518 = vld [vmem:[%s404 + $0x8] sm:$0xff]
        %v519 = vld [vmem:[%s404 + $0x10] sm:$0xff]
        %v520 = vld [vmem:[%s414] sm:$0xff]
        %v521 = vld [vmem:[%s414 + $0x8] sm:$0xff]
        %v522 = vld [vmem:[%s414 + $0x10] sm:$0xff]
        %v523 = vld [vmem:[%s414 + $0x18] sm:$0xff]
        %v524 = vld [vmem:[%s414 + $0x20] sm:$0xff]
        %v525 = vld [vmem:[%s414 + $0x28] sm:$0xff]
        %v526 = vld [vmem:[%s414 + $0x30] sm:$0xff]
        %v527 = vld [vmem:[%s414 + $0x38] sm:$0xff]
        %v528 = vld [vmem:[%s414 + $0x40] sm:$0xff]
        %v529 = vld [vmem:[%s414 + $0x48] sm:$0xff]
        %v530 = vld [vmem:[%s414 + $0x50] sm:$0xff]
        %v531 = vld [vmem:[%s414 + $0x58] sm:$0xff]
        %v532 = vld [vmem:[%s414 + $0x60] sm:$0xff]
        %v533 = vld [vmem:[%s414 + $0x68] sm:$0xff]
        %v534 = vld [vmem:[%s414 + $0x70] sm:$0xff]
        %v535 = vld [vmem:[%s414 + $0x78] sm:$0xff]
        %536 = vmatpush.msra.mxu0 %v535
        %537 = vmatpush.msra.mxu0 %v534
        %538 = vmatpush.msra.mxu0 %v533
        %539 = vmatpush.msra.mxu0 %v532
        %540 = vmatpush.msra.mxu0 %v531
        %541 = vmatpush.msra.mxu0 %v530
        %542 = vmatpush.msra.mxu0 %v529
        %543 = vmatpush.msra.mxu0 %v528
        %544 = vmatpush.msra.mxu0 %v527
        %545 = vmatpush.msra.mxu0 %v526
        %546 = vmatpush.msra.mxu0 %v525
        %547 = vmatpush.msra.mxu0 %v524
        %548 = vmatpush.msra.mxu0 %v523
        %549 = vmatpush.msra.mxu0 %v522
        %550 = vmatpush.msra.mxu0 %v521
        %551 = vmatpush.msra.mxu0 %v520
        %552 = vmatmul.f32.gmra.mxu0 %v517
        %v553 = vpop.f32.mrf.mxu0
        %v554 = vadd.f32 0.0, %v553
        %555 = vmatmul.f32.gmra.mxu0 %v518
        %v556 = vpop.f32.mrf.mxu0
        %v557 = vadd.f32 0.0, %v556
        %558 = vmatmul.f32.gmra.mxu0 %v519
        %v559 = vpop.f32.mrf.mxu0
        %v560 = vadd.f32 0.0, %v559
        %561 = vdwg.mxu0
        %v562 = vld [vmem:[%s424] sm:$0xff]
        %v563 = vld [vmem:[%s424 + $0x8] sm:$0xff]
        %v564 = vld [vmem:[%s424 + $0x10] sm:$0xff]
        %v565 = vld [vmem:[%s434] sm:$0xff]
        %v566 = vld [vmem:[%s434 + $0x8] sm:$0xff]
        %v567 = vld [vmem:[%s434 + $0x10] sm:$0xff]
        %v568 = vld [vmem:[%s444] sm:$0xff]
        %v569 = vld [vmem:[%s444 + $0x8] sm:$0xff]
        %v570 = vld [vmem:[%s444 + $0x10] sm:$0xff]
        %v571 = vld [vmem:[%s444 + $0x18] sm:$0xff]
        %v572 = vld [vmem:[%s444 + $0x20] sm:$0xff]
        %v573 = vld [vmem:[%s444 + $0x28] sm:$0xff]
        %v574 = vld [vmem:[%s444 + $0x30] sm:$0xff]
        %v575 = vld [vmem:[%s444 + $0x38] sm:$0xff]
        %v576 = vld [vmem:[%s444 + $0x40] sm:$0xff]
        %v577 = vld [vmem:[%s444 + $0x48] sm:$0xff]
        %v578 = vld [vmem:[%s444 + $0x50] sm:$0xff]
        %v579 = vld [vmem:[%s444 + $0x58] sm:$0xff]
        %v580 = vld [vmem:[%s444 + $0x60] sm:$0xff]
        %v581 = vld [vmem:[%s444 + $0x68] sm:$0xff]
        %v582 = vld [vmem:[%s444 + $0x70] sm:$0xff]
        %v583 = vld [vmem:[%s444 + $0x78] sm:$0xff]
        %584 = vmatpush.msra.mxu0 %v583
        %585 = vmatpush.msra.mxu0 %v582
        %586 = vmatpush.msra.mxu0 %v581
        %587 = vmatpush.msra.mxu0 %v580
        %588 = vmatpush.msra.mxu0 %v579
        %589 = vmatpush.msra.mxu0 %v578
        %590 = vmatpush.msra.mxu0 %v577
        %591 = vmatpush.msra.mxu0 %v576
        %592 = vmatpush.msra.mxu0 %v575
        %593 = vmatpush.msra.mxu0 %v574
        %594 = vmatpush.msra.mxu0 %v573
        %595 = vmatpush.msra.mxu0 %v572
        %596 = vmatpush.msra.mxu0 %v571
        %597 = vmatpush.msra.mxu0 %v570
        %598 = vmatpush.msra.mxu0 %v569
        %599 = vmatpush.msra.mxu0 %v568
        %600 = vmatmul.f32.gmra.mxu0 %v565
        %v601 = vpop.f32.mrf.mxu0
        %v602 = vadd.f32 0.0, %v601
        %603 = vmatmul.f32.gmra.mxu0 %v566
        %v604 = vpop.f32.mrf.mxu0
        %v605 = vadd.f32 0.0, %v604
        %606 = vmatmul.f32.gmra.mxu0 %v567
        %v607 = vpop.f32.mrf.mxu0
        %v608 = vadd.f32 0.0, %v607
        %609 = vdwg.mxu0
        %v610 = vld [vmem:[%s454] sm:$0xff]
        %v611 = vld [vmem:[%s454 + $0x8] sm:$0xff]
        %v612 = vld [vmem:[%s454 + $0x10] sm:$0xff]
        %613 = vxpose.xlu0.b32.start [1/16] %v610, 128
        %614 = vxpose.xlu0.b32.cont [2/16] %v611, 128
        %615 = vxpose.xlu0.b32.cont [3/16] %v612, 128
        %616 = vxpose.xlu0.b32.cont [4/16] 0.0, 128
        %617 = vxpose.xlu0.b32.cont [5/16] 0.0, 128
        %618 = vxpose.xlu0.b32.cont [6/16] 0.0, 128
        %619 = vxpose.xlu0.b32.cont [7/16] 0.0, 128
        %620 = vxpose.xlu0.b32.cont [8/16] 0.0, 128
        %621 = vxpose.xlu0.b32.cont [9/16] 0.0, 128
        %622 = vxpose.xlu0.b32.cont [10/16] 0.0, 128
        %623 = vxpose.xlu0.b32.cont [11/16] 0.0, 128
        %624 = vxpose.xlu0.b32.cont [12/16] 0.0, 128
        %625 = vxpose.xlu0.b32.cont [13/16] 0.0, 128
        %626 = vxpose.xlu0.b32.cont [14/16] 0.0, 128
        %627 = vxpose.xlu0.b32.cont [15/16] 0.0, 128
        %628 = vxpose.xlu0.b32.end [16/16] 0.0, 128
        %v629 = vpop.trf.xlu0
        %v630 = vpop.trf.xlu0
        %v631 = vpop.trf.xlu0
        %v632 = vpop.trf.xlu0
        %v633 = vpop.trf.xlu0
        %v634 = vpop.trf.xlu0
        %v635 = vpop.trf.xlu0
        %v636 = vpop.trf.xlu0
        %v637 = vpop.trf.xlu0
        %v638 = vpop.trf.xlu0
        %v639 = vpop.trf.xlu0
        %v640 = vpop.trf.xlu0
        %v641 = vpop.trf.xlu0
        %v642 = vpop.trf.xlu0
        %v643 = vpop.trf.xlu0
        %v644 = vpop.trf.xlu0
        %vm645 = vcmask 195584
        %v647 = vsel %vm645, %v629, 0
        %v650 = vsel %vm645, %v630, 0
        %v653 = vsel %vm645, %v631, 0
        %655 = vmatpush.msra.mxu0 0.0
        %656 = vmatpush.msra.mxu0 0.0
        %657 = vmatpush.msra.mxu0 0.0
        %658 = vmatpush.msra.mxu0 0.0
        %659 = vmatpush.msra.mxu0 0.0
        %660 = vmatpush.msra.mxu0 0.0
        %661 = vmatpush.msra.mxu0 0.0
        %662 = vmatpush.msra.mxu0 0.0
        %663 = vmatpush.msra.mxu0 0.0
        %664 = vmatpush.msra.mxu0 0.0
        %665 = vmatpush.msra.mxu0 0.0
        %666 = vmatpush.msra.mxu0 0.0
        %667 = vmatpush.msra.mxu0 0.0
        %668 = vmatpush.msra.mxu0 %v608
        %669 = vmatpush.msra.mxu0 %v605
        %670 = vmatpush.msra.mxu0 %v602
        %671 = vmatmul.f32.gmra.mxu0 %v647
        %v672 = vpop.f32.mrf.mxu0
        %v673 = vadd.f32 0.0, %v672
        %674 = vmatmul.f32.gmra.mxu0 %v650
        %v675 = vpop.f32.mrf.mxu0
        %v676 = vadd.f32 0.0, %v675
        %677 = vmatmul.f32.gmra.mxu0 %v653
        %v678 = vpop.f32.mrf.mxu0
        %v679 = vadd.f32 0.0, %v678
        %680 = vdwg.mxu0
        %v682 = vsel %vm645, %v562, 0
        %v685 = vsel %vm645, %v563, 0
        %v688 = vsel %vm645, %v564, 0
        %690 = vmatpush.msra.mxu0 0.0
        %691 = vmatpush.msra.mxu0 0.0
        %692 = vmatpush.msra.mxu0 0.0
        %693 = vmatpush.msra.mxu0 0.0
        %694 = vmatpush.msra.mxu0 0.0
        %695 = vmatpush.msra.mxu0 0.0
        %696 = vmatpush.msra.mxu0 0.0
        %697 = vmatpush.msra.mxu0 0.0
        %698 = vmatpush.msra.mxu0 0.0
        %699 = vmatpush.msra.mxu0 0.0
        %700 = vmatpush.msra.mxu0 0.0
        %701 = vmatpush.msra.mxu0 0.0
        %702 = vmatpush.msra.mxu0 0.0
        %703 = vmatpush.msra.mxu0 %v560
        %704 = vmatpush.msra.mxu0 %v557
        %705 = vmatpush.msra.mxu0 %v554
        %706 = vmatmul.f32.gmra.mxu0 %v682
        %v707 = vpop.f32.mrf.mxu0
        %v708 = vadd.f32 %v673, %v707
        %709 = vmatmul.f32.gmra.mxu0 %v685
        %v710 = vpop.f32.mrf.mxu0
        %v711 = vadd.f32 %v676, %v710
        %712 = vmatmul.f32.gmra.mxu0 %v688
        %v713 = vpop.f32.mrf.mxu0
        %v714 = vadd.f32 %v679, %v713
        %715 = vdwg.mxu0
        %v716 = vld [vmem:[%s516] sm:$0x1]
        %v718 = vperm.slane %v716, 0
        %v720 = vadd.f32 %v708, %v718
        %v721 = vadd.f32 %v711, %v718
        %v722 = vadd.f32 %v714, %v718
        %v723 = vmax.f32 %v720, 0.0
        %v724 = vmax.f32 %v721, 0.0
        %v725 = vmax.f32 %v722, 0.0
        %726 = vst [vmem:[%s513] sm:$0xff] %v723
        %727 = vst [vmem:[%s513 + $0x8] sm:$0xff] %v724
        %728 = vst [vmem:[%s513 + $0x10] sm:$0xff] %v725
        %s729 = sand.u32 %s223, 1
        %s730 = scalar_lea.sflag [#allocation4], %s729
        %s731 = sand.u32 %s223, 1
        %s732 = smul.addr %s731, 24
        %s733 = scalar_lea.vmem [#allocation13], %s732
        // Predicated region
        $region73: #{tpu_custom_call.1} parent=47 // pred_check
          %p734 = pneg %p233
        $region74: #{tpu_custom_call.1} parent=47 // pred_check_branch
          %736 = sbr.rel (%p734) target = $region76
        $region75: #{tpu_custom_call.1} parent=47 // pred_region
          %738 = vsyncadd %s730, 0
          %s739 = smul.addr %s33, 3
          %s740 = smul.addr %s739, 8
          %s741 = scalar_lea.hbm %s7, %s740
          %s742 = sshll.u32 %s733, 4
          %s743 = int_to_ptr.vmem [resolvable:$true] %s742
          %s744 = sshll.u32 %s741, 4
          %s745 = int_to_ptr.hbm [resolvable:$true] %s744
          %750 = dma.vmem_to_hbm [thread:$0]  %s743, 384, %s745, %s730, 128, 128, 8
        $region76: #{tpu_custom_call.1} parent=47 // pred_fallthru
          _
      $region48: #{tpu_custom_call.1} parent=5 // pred_fallthru
        _
      %p751 = scmp.le.s32.totalorder 2, %s28
      // Predicated region
      $region77: #{tpu_custom_call.1} parent=5 // pred_check
        %p752 = pneg %p751
      $region78: #{tpu_custom_call.1} parent=5 // pred_check_branch
        %754 = sbr.rel (%p752) target = $region80
      $region79: #{tpu_custom_call.1} parent=5 // pred_region
        %s755 = ssub.s32 %s28, 2
        // Predicated region
        $region81: #{tpu_custom_call.1} parent=79 // pred_check
          %p756 = pneg %p239
        $region82: #{tpu_custom_call.1} parent=79 // pred_check_branch
          %758 = sbr.rel (%p756) target = $region84
        $region83: #{tpu_custom_call.1} parent=79 // pred_region
          %s759 = sand.u32 %s224, 1
          %s760 = scalar_lea.sflag [#allocation4], %s759
          %s761 = sand.u32 %s224, 1
          %s762 = smul.addr %s761, 24
          %s763 = scalar_lea.vmem [#allocation13], %s762
          %765 = dma.done %s760, 384
        $region84: #{tpu_custom_call.1} parent=79 // pred_fallthru
          _
      $region80: #{tpu_custom_call.1} parent=5 // pred_fallthru
        _
    $region6: #{tpu_custom_call.1} parent=1 // loop_footer
      %s32 = sadd.s32 1, %s28
    $region7: #{tpu_custom_call.1} parent=1 // loop_footer_branch
      %27 = sbr.rel target = $region3
    $region8: #{tpu_custom_call.1} parent=1 // loop_exit
      _
    %766 = vsyncpa [#allocation3], 1
    %s767 = scalar_lea.sflag [#allocation3], 1
    %768 = vsyncpa %s767, 1
    %769 = vsyncpa [#allocation6], 1
    %s770 = scalar_lea.sflag [#allocation6], 1
    %771 = vsyncpa %s770, 1
    %772 = vsyncpa [#allocation9], 1
    %s773 = scalar_lea.sflag [#allocation9], 1
    %774 = vsyncpa %s773, 1
    %775 = vsyncpa [#allocation12], 1
    %s776 = scalar_lea.sflag [#allocation12], 1
    %777 = vsyncpa %s776, 1
    %778 = vsyncpa [#allocation4], 1
    %s779 = scalar_lea.sflag [#allocation4], 1
    %780 = vsyncpa %s779, 1

</llo_original>
